<compile_context>
chip_gen: v5e
topology: v5e:2x2
jax: 0.10.0
libtpu: 0.0.40
codegen_flags: <defaults>
</compile_context>

<pallas_src>
import math

import jax
import jax.numpy as jnp
from jax.experimental import pallas as pl
from jax.experimental.pallas import tpu as pltpu


def _squeeze_last_two_dma_kernel(x_hbm_ref, o_hbm_ref, copy_sem):
    # One DMA for the whole (B, C) slab, HBM -> HBM.  The body never touches
    # vregs; the DMA engine does all the data movement.
    copy = pltpu.make_async_copy(x_hbm_ref, o_hbm_ref, copy_sem)
    copy.start()
    copy.wait()


def squeeze_last_two(x):
    """x: (B, C, 1, 1) -> (B, C), same dtype (torch .view(B, C) semantics)."""
    assert x.ndim >= 2 and math.prod(x.shape[2:]) == 1, (
        "SqueezeLastTwo expects trailing singleton dims, got %s" % (x.shape,)
    )
    B, C = x.shape[0], x.shape[1]

    # Metadata-only reshape (free in XLA); the kernel just copies it into the
    # fresh (B, C) output buffer via a single DMA.
    x2 = jnp.reshape(x, (B, C))

    return pl.pallas_call(
        _squeeze_last_two_dma_kernel,
        out_shape=jax.ShapeDtypeStruct((B, C), x.dtype),
        # Both operands stay in place (HBM); no BlockSpec tiling, no grid,
        # no per-step overhead, ~zero VMEM footprint.
        in_specs=[pl.BlockSpec(memory_space=pl.ANY)],
        out_specs=pl.BlockSpec(memory_space=pl.ANY),
        scratch_shapes=[pltpu.SemaphoreType.DMA],
    )(x2)


if __name__ == "__main__":
    key = jax.random.PRNGKey(0)
    B, C = 2, 4
    x = jax.random.normal(key, (B, C, 1, 1), dtype=jnp.float32)

    out = jax.block_until_ready(squeeze_last_two(x))

    # Reference check against plain JAX reshape (== torch .view semantics).
    ref = jnp.reshape(x, (B, C))
    assert out.shape == (B, C)
    assert out.dtype == x.dtype
    assert bool(jnp.array_equal(out, ref))

    print("KERNEL_OK")
</pallas_src>

<mosaic_0001>
module attributes {stable_mosaic.version = 11 : i64} {
  func.func @_squeeze_last_two_dma_kernel(%arg0: memref<2x4xf32, #tpu.memory_space<any>>, %arg1: memref<2x4xf32, #tpu.memory_space<any>>, %arg2: memref<!tpu.dma_semaphore, #tpu.memory_space<semaphore_mem>>) attributes {dimension_semantics = [], scalar_prefetch = 0 : i64, scratch_operands = 1 : i64, tpu.core_type = #tpu.core_type<tc>} {
    tpu.enqueue_dma source(%arg0 : memref<2x4xf32, #tpu.memory_space<any>>) target(%arg1 : memref<2x4xf32, #tpu.memory_space<any>>) target_semaphore(%arg2 : memref<!tpu.dma_semaphore, #tpu.memory_space<semaphore_mem>>)
    tpu.wait_dma2 semaphore(%arg2 : memref<!tpu.dma_semaphore, #tpu.memory_space<semaphore_mem>>) src(%arg0 : memref<2x4xf32, #tpu.memory_space<any>>) dst(%arg1 : memref<2x4xf32, #tpu.memory_space<any>>)
    return
  }
}

</mosaic_0001>

<llo_original>
// kernel: tpu_custom_call.1
$region0: #{tpu_custom_call.1}
  #allocation0 [shape = 'u32[]', space=smem, size = 0x4, offset = 0x4, fixed_abs, tag = 'smem constant byte address 0x4 - core index']
  #allocation1 [shape = 'u32[72,128]{1,0:T(1,128)}', space=vmem, size = 0x9000, scoped, tag = 'internal scratch']
  #allocation2 [shape = 's32[1]{0}', space=sflag, size = 0x4, scoped, tag = 'scratch operand']
  #allocation3 [shape = 's32[]', space=sflag, size = 0x4, offset = 0, fixed_abs, tag = 'sflag constant byte address 0x0 - dummy sync flag']
  #allocation4 [shape = 'u32[0]{0}', space=smem, size = 0, offset = 0, fixed_abs, tag = 'smem constant byte address 0x0 - null']
  %s0 = inlined_call_operand.hbm [shape: f32[2,4], index: 0, kind: input, shape index: {}]
  %s1 = inlined_call_operand.hbm [shape: f32[2,4], index: 1, kind: output, shape index: {}]
  %s2 = sld [smem:[#allocation0]]
  $region2: #{tpu_custom_call.1} parent=0
    _
  %s4 = ssub.s32 1, %s2
  %s5 = scalar_select 0, %s4, %s2
  %s7 = sshll.u32 1, 14
  %s8 = sxor.u32 4294967295, %s7
  %s10 = sshll.u32 %s0, 4
  %s11 = int_to_ptr.hbm [resolvable:$true] %s10
  %s12 = sshll.u32 %s1, 4
  %s13 = int_to_ptr.hbm [resolvable:$true] %s12
  %16 = dma.general %s11, 32, %s13, [#allocation2], [#allocation3], [#allocation4], 0, 0
  %s17 = smul.u32 2, 1
  %s18 = sshll.u32 %s17, 4
  %19 = dma.done [#allocation2], %s18
  %20 = vsyncmov [#allocation2]
  %s21 = vpop.sfrf %20
  %p22 = scmp.eq.s32.totalorder %s21, 0
  %p23 = pneg %p22
  %25 = shalt.err (%p23)

</llo_original>
